<compile_context>
chip_gen: v5e
topology: v5e:2x2
jax: 0.10.0
libtpu: 0.0.40
codegen_flags: <defaults>
</compile_context>

<pallas_src>
import numpy as np
import jax
import jax.numpy as jnp
from jax import lax
from jax.experimental import pallas as pl
from jax.experimental.pallas import tpu as pltpu


def _elu(v):
    # TODO(synk): jnp.expm1 would be marginally more accurate near 0; exp-1 is
    # kept to stay on a known-supported Mosaic lowering path (forward is safe).
    return jnp.where(v > 0, v, jnp.exp(v) - 1.0)


def _round_up(a, b):
    return -(-a // b) * b


def make_kernel(E, T, K1, n_spec, encode_info, Bt, TS, M, R, Eg, c_max):
    """Builds the fused kernel for one (Bt, E, T) batch block."""
    T1 = T - K1 + 1
    W = Bt * TS
    n_layers = len(encode_info)

    def kernel(*refs):
        seg_ref, x_ref, wspec_ref, bspec_ref, wspat_ref, bspat_ref = refs[:6]
        layer_refs = refs[6:6 + 3 * n_layers]
        out_ref = refs[6 + 3 * n_layers]
        xp_ref, sp_ref, pad_ref = refs[6 + 3 * n_layers + 1:]

        seg_off = seg_ref[...]                 # (1, W) int32, = lane % TS

        # ---- stage x into the batch-packed layout: xp[e, b*TS + t] = x[b,e,t]
        for b in range(Bt):
            xp_ref[:, b * TS:b * TS + T] = x_ref[b]

        # Zero only the padding regions that valid lanes can read:
        #   * left margin of the depthwise staging buffer (conv "same" pad),
        #   * electrode-padding rows of the stacked spectral buffer (they feed
        #     the spatial matmul contraction; 0*garbage != 0 if the garbage is
        #     inf/NaN, so they must really be zero).
        # Done every grid step (cheap) so megacore grid sharding stays safe.
        if M > 0:
            pad_ref[:, 0:M] = jnp.zeros((c_max, M), jnp.float32)
        if Eg != E:
            for c in range(n_spec):
                sp_ref[c * Eg + E:(c + 1) * Eg, :] = jnp.zeros(
                    (Eg - E, W), jnp.float32)

        # ---- spectral conv (1 -> n_spec, kernel (1, K1)) + ELU.
        # Each window of xp is loaded once and reused for all spectral chans.
        accs = [None] * n_spec
        for k in range(K1):
            win = xp_ref[:, k:k + W]                       # (E, W)
            for c in range(n_spec):
                term = win * wspec_ref[c, k]
                accs[c] = term if accs[c] is None else accs[c] + term
        for c in range(n_spec):
            sp_ref[c * Eg:c * Eg + E, :] = _elu(accs[c] + bspec_ref[c])

        # ---- spatial conv fused as ONE lane-dense MXU matmul:
        #      (n_spat, n_spec*Eg) @ (n_spec*Eg, Bt*TS)
        h = _elu(jnp.dot(wspat_ref[...], sp_ref[...],
                         preferred_element_type=jnp.float32) + bspat_ref[...])
        t_cur = T1

        # ---- separable conv stack (BatchNorm pre-folded into the weights):
        #      depthwise taps (VPU FMAs) + pointwise 1x1 (MXU matmul) + ELU
        for li, (cin, cout, kt, pt) in enumerate(encode_info):
            w_dw, w_pw, b_pw = layer_refs[3 * li:3 * li + 3]
            # Zero invalid per-segment tail columns (select, not multiply, so
            # garbage/NaN from unused lanes cannot leak into the padding).
            h_m = jnp.where(seg_off < t_cur, h, 0.0)
            pad_ref[0:cin, M:M + W] = h_m

            t_out = t_cur + 2 * pt - kt + 1
            dw = None
            for k in range(kt):
                win = pad_ref[0:cin, M - pt + k:M - pt + k + W]
                term = w_dw[:, k:k + 1] * win              # depthwise tap
                dw = term if dw is None else dw + term
            h = _elu(jnp.dot(w_pw[...], dw,                # pointwise 1x1,
                             preferred_element_type=jnp.float32)  # lane-dense
                     + b_pw[...])
            t_cur = t_out

        # ---- AdaptiveMaxPool2d(1): per-batch, per-channel max over valid time
        for b in range(Bt):
            seg = h[:, b * TS:b * TS + t_cur]
            out_ref[b, :] = jnp.max(seg, axis=1)

    return kernel


def sbp_raw_encoder(x, params, encode_info):
    B, E, T = x.shape
    w_spec = params["w_spec"]                        # (n_spec, K1)
    n_spec, K1 = w_spec.shape
    w_spat = params["w_spat"]                        # (n_spat, n_spec, E)
    n_spat = w_spat.shape[0]
    T1 = T - K1 + 1
    assert T1 >= 1
    c_final = encode_info[-1][1] if encode_info else n_spat

    # Per-batch segment stride TS and pad-buffer margins.
    ts_req = [T, T1]
    M = 0
    R = 0
    c_max = 1
    t = T1
    for (cin, cout, kt, pt) in encode_info:
        ts_req.append(t + pt)
        t = t + 2 * pt - kt + 1
        assert t >= 1, "temporal dim vanished in encoder stack"
        ts_req.append(t)
        M = max(M, pt)
        R = max(R, kt - 1 - pt, 0)
        c_max = max(c_max, cin)
    TS = max(ts_req)

    # Batch block size: whole batch if small, else a multiple of 8 targeting
    # ~512 lanes per grid step (lane-dense matmuls and stores).
    lane_target = 512
    if B * TS <= lane_target or B <= 8:
        Bt = B
    else:
        Bt = max(8, (min(B, max(1, lane_target // TS)) // 8) * 8)
    Bp = _round_up(B, Bt)
    if Bp != B:
        x = jnp.concatenate([x, jnp.zeros((Bp - B, E, T), x.dtype)], axis=0)
    W = Bt * TS
    Eg = _round_up(E, 8)

    # Per-segment time index for masking invalid tail lanes (host-computed,
    # broadcast to every grid step -> no in-kernel div/mod or unrolled chain).
    seg_off = jnp.asarray((np.arange(W) % TS)[None, :], jnp.int32)

    # Spatial weight reshaped to (n_spat, n_spec*Eg) with zero-padded rows so
    # the fused spatial conv is a single matmul against the stacked buffer.
    w_spat_p = jnp.pad(w_spat, ((0, 0), (0, 0), (0, Eg - E)))
    w_spat_p = w_spat_p.reshape(n_spat, n_spec * Eg)
    b_spat = params["b_spat"].reshape(n_spat, 1)

    in_specs = [
        pl.BlockSpec((1, W), lambda g: (0, 0)),                       # seg_off
        pl.BlockSpec((Bt, E, T), lambda g: (g, 0, 0)),                # x block
        pl.BlockSpec(memory_space=pltpu.MemorySpace.SMEM),            # w_spec
        pl.BlockSpec(memory_space=pltpu.MemorySpace.SMEM),            # b_spec
        pl.BlockSpec(w_spat_p.shape, lambda g: (0, 0)),               # w_spat
        pl.BlockSpec(b_spat.shape, lambda g: (0, 0)),                 # b_spat
    ]
    args = [seg_off, x, w_spec, params["b_spec"], w_spat_p, b_spat]

    # Fold eval-mode BatchNorm (scale s, shift t) into the conv weights once
    # on the host: kernel then does depthwise taps + (W_eff @ dw + b_eff).
    for lp in params["layers"]:
        w_pw0 = lp["w_pw"]
        w_dw = lp["w_dw"]                                        # (cin, kt)
        w_pw = (lp["s_pw"] * w_pw0) * lp["s_dw"].reshape(1, -1)  # (cout, cin)
        b_pw = lp["s_pw"] * jnp.dot(w_pw0, lp["t_dw"]) + lp["t_pw"]  # (cout,1)
        for a in (w_dw, w_pw, b_pw):
            args.append(a)
            in_specs.append(pl.BlockSpec(a.shape, lambda g: (0, 0)))

    grid_spec = pltpu.PrefetchScalarGridSpec(
        num_scalar_prefetch=0,
        grid=(Bp // Bt,),
        in_specs=in_specs,
        out_specs=pl.BlockSpec((Bt, c_final), lambda g: (g, 0)),
        scratch_shapes=[
            pltpu.VMEM((E, W + K1), jnp.float32),          # packed x
            pltpu.VMEM((n_spec * Eg, W), jnp.float32),     # stacked spectral
            pltpu.VMEM((c_max, M + W + R), jnp.float32),   # depthwise staging
        ],
    )

    kernel = make_kernel(E, T, K1, n_spec, encode_info,
                         Bt, TS, M, R, Eg, c_max)
    out = pl.pallas_call(
        kernel,
        out_shape=jax.ShapeDtypeStruct((Bp, c_final), jnp.float32),
        grid_spec=grid_spec,
        compiler_params=pltpu.CompilerParams(
            dimension_semantics=("parallel",),        # batch blocks independent
            vmem_limit_bytes=32 * 1024 * 1024),
    )(*args)
    return out[:B]


def init_params(key, fs, electrode, encode_info, n_spec=4, n_spat=16):
    K1 = fs // 2
    E = electrode
    keys = list(jax.random.split(key, 8 + 2 * len(encode_info)))
    it = iter(keys)

    def xavier(k, shape, fan_in, fan_out):
        a = (6.0 / (fan_in + fan_out)) ** 0.5
        return jax.random.uniform(k, shape, jnp.float32, -a, a)

    def unif(k, shape, bound):
        return jax.random.uniform(k, shape, jnp.float32, -bound, bound)

    w_spec = xavier(next(it), (n_spec, K1), 1 * K1, n_spec * K1)
    b_spec = unif(next(it), (n_spec,), 1.0 / (1 * K1) ** 0.5)
    w_spat = xavier(next(it), (n_spat, n_spec, E), n_spec * E, n_spat * E)
    b_spat = unif(next(it), (n_spat,), 1.0 / (n_spec * E) ** 0.5)

    eps = 1e-5
    bn_scale = 1.0 / (1.0 + eps) ** 0.5   # eval-mode BN with default stats
    layers = []
    for (cin, cout, kt, pt) in encode_info:
        w_dw = unif(next(it), (cin, kt), 1.0 / kt ** 0.5)
        w_pw = unif(next(it), (cout, cin), 1.0 / cin ** 0.5)
        layers.append(dict(
            w_dw=w_dw,
            s_dw=jnp.full((cin, 1), bn_scale, jnp.float32),
            t_dw=jnp.zeros((cin, 1), jnp.float32),
            w_pw=w_pw,
            s_pw=jnp.full((cout, 1), bn_scale, jnp.float32),
            t_pw=jnp.zeros((cout, 1), jnp.float32),
        ))
    return dict(w_spec=w_spec, b_spec=b_spec, w_spat=w_spat, b_spat=b_spat,
                layers=layers)


def reference(x, params, encode_info):
    """Pure-JAX reference (BN kept explicit, validates the host-side fold)."""
    w_spec, b_spec = params["w_spec"], params["b_spec"]
    w_spat, b_spat = params["w_spat"], params["b_spat"]
    K1 = w_spec.shape[1]
    B, E, T = x.shape
    T1 = T - K1 + 1
    patches = jnp.stack([x[:, :, k:k + T1] for k in range(K1)], axis=-1)
    y1 = jnp.einsum('betk,ck->bcet', patches, w_spec) + b_spec[None, :, None, None]
    y1 = _elu(y1)
    h = jnp.einsum('oce,bcet->bot', w_spat, y1) + b_spat[None, :, None]
    h = _elu(h)
    for lp, (cin, cout, kt, pt) in zip(params["layers"], encode_info):
        hp = jnp.pad(h, ((0, 0), (0, 0), (pt, pt)))
        t_out = h.shape[-1] + 2 * pt - kt + 1
        dw = jnp.zeros((B, cin, t_out), jnp.float32)
        for k in range(kt):
            dw = dw + lp["w_dw"][None, :, k:k + 1] * hp[:, :, k:k + t_out]
        dw = dw * lp["s_dw"][None] + lp["t_dw"][None]
        pw = jnp.einsum('oc,bct->bot', lp["w_pw"], dw)
        h = _elu(pw * lp["s_pw"][None] + lp["t_pw"][None])
    return jnp.max(h, axis=-1)


if __name__ == "__main__":
    fs, electrode = 8, 4           # -> spectral kernel width fs//2 = 4
    B, T = 2, 16
    # (in_dim, out_dim, kernel_time, pad_time) per SeparableConv2d block,
    # i.e. kernel (1, kernel_time), padding (0, pad_time) on the (1, T) map.
    encode_info = [(16, 32, 3, 1), (32, 32, 3, 1)]

    key = jax.random.PRNGKey(0)
    kx, kp = jax.random.split(key)
    x = jax.random.normal(kx, (B, electrode, T), jnp.float32)
    params = init_params(kp, fs, electrode, encode_info)

    out = jax.block_until_ready(sbp_raw_encoder(x, params, encode_info))
    ref = reference(x, params, encode_info)

    assert out.shape == (B, encode_info[-1][1]), out.shape
    if not jnp.allclose(out, ref, atol=1e-4, rtol=1e-4):
        raise AssertionError(
            f"mismatch, max abs err = {float(jnp.max(jnp.abs(out - ref)))}")
    print("KERNEL_OK")
</pallas_src>

<mosaic_0001>
module attributes {stable_mosaic.version = 11 : i64} {
  func.func @kernel(%arg0: i32, %arg1: memref<1x32xi32, #tpu.memory_space<vmem>>, %arg2: memref<2x4x16xf32, #tpu.memory_space<vmem>>, %arg3: memref<4x4xf32, #tpu.memory_space<smem>>, %arg4: memref<4xf32, #tpu.memory_space<smem>>, %arg5: memref<16x32xf32, #tpu.memory_space<vmem>>, %arg6: memref<16x1xf32, #tpu.memory_space<vmem>>, %arg7: memref<16x3xf32, #tpu.memory_space<vmem>>, %arg8: memref<32x16xf32, #tpu.memory_space<vmem>>, %arg9: memref<32x1xf32, #tpu.memory_space<vmem>>, %arg10: memref<32x3xf32, #tpu.memory_space<vmem>>, %arg11: memref<32x32xf32, #tpu.memory_space<vmem>>, %arg12: memref<32x1xf32, #tpu.memory_space<vmem>>, %arg13: memref<2x32xf32, #tpu.memory_space<vmem>>, %arg14: memref<4x36xf32, #tpu.memory_space<vmem>>, %arg15: memref<32x32xf32, #tpu.memory_space<vmem>>, %arg16: memref<32x34xf32, #tpu.memory_space<vmem>>) attributes {dimension_semantics = [#tpu.dimension_semantics<parallel>], iteration_bounds = array<i64: 1>, scalar_prefetch = 0 : i64, scratch_operands = 3 : i64, tpu.core_type = #tpu.core_type<tc>, window_params = [{pipeline_mode = #tpu.pipeline_mode<synchronous>, transform_indices = @transform_0, window_bounds = array<i64: 1, 32>}, {transform_indices = @transform_1, window_bounds = array<i64: 2, 4, 16>}, {transform_indices = @transform_2, window_bounds = array<i64: 4, 4>}, {transform_indices = @transform_3, window_bounds = array<i64: 4>}, {pipeline_mode = #tpu.pipeline_mode<synchronous>, transform_indices = @transform_4, window_bounds = array<i64: 16, 32>}, {pipeline_mode = #tpu.pipeline_mode<synchronous>, transform_indices = @transform_5, window_bounds = array<i64: 16, 1>}, {pipeline_mode = #tpu.pipeline_mode<synchronous>, transform_indices = @transform_6, window_bounds = array<i64: 16, 3>}, {pipeline_mode = #tpu.pipeline_mode<synchronous>, transform_indices = @transform_7, window_bounds = array<i64: 32, 16>}, {pipeline_mode = #tpu.pipeline_mode<synchronous>, transform_indices = @transform_8, window_bounds = array<i64: 32, 1>}, {pipeline_mode = #tpu.pipeline_mode<synchronous>, transform_indices = @transform_9, window_bounds = array<i64: 32, 3>}, {pipeline_mode = #tpu.pipeline_mode<synchronous>, transform_indices = @transform_10, window_bounds = array<i64: 32, 32>}, {pipeline_mode = #tpu.pipeline_mode<synchronous>, transform_indices = @transform_11, window_bounds = array<i64: 32, 1>}, {transform_indices = @transform_12, window_bounds = array<i64: 2, 32>}]} {
    %c0 = arith.constant 0 : index
    %c0_0 = arith.constant 0 : index
    %0 = vector.load %arg1[%c0, %c0_0] : memref<1x32xi32, #tpu.memory_space<vmem>>, vector<1x32xi32>
    %c0_1 = arith.constant 0 : index
    %c0_2 = arith.constant 0 : index
    %c0_3 = arith.constant 0 : index
    %1 = vector.load %arg2[%c0_1, %c0_2, %c0_3] : memref<2x4x16xf32, #tpu.memory_space<vmem>>, vector<1x4x16xf32>
    %2 = vector.shape_cast %1 : vector<1x4x16xf32> to vector<4x16xf32>
    %c0_4 = arith.constant 0 : index
    %c0_5 = arith.constant 0 : index
    %3 = vector.load %arg14[%c0_4, %c0_5] : memref<4x36xf32, #tpu.memory_space<vmem>>, vector<4x16xf32>
    tpu.vector_store %arg14[%c0_4, %c0_5], %2 {strides = array<i32>} : memref<4x36xf32, #tpu.memory_space<vmem>>, vector<4x16xf32>,
    %c1 = arith.constant 1 : index
    %c0_6 = arith.constant 0 : index
    %c0_7 = arith.constant 0 : index
    %4 = vector.load %arg2[%c1, %c0_6, %c0_7] : memref<2x4x16xf32, #tpu.memory_space<vmem>>, vector<1x4x16xf32>
    %5 = vector.shape_cast %4 : vector<1x4x16xf32> to vector<4x16xf32>
    %c0_8 = arith.constant 0 : index
    %c16 = arith.constant 16 : index
    %6 = vector.load %arg14[%c0_8, %c16] : memref<4x36xf32, #tpu.memory_space<vmem>>, vector<4x16xf32>
    tpu.vector_store %arg14[%c0_8, %c16], %5 {strides = array<i32>} : memref<4x36xf32, #tpu.memory_space<vmem>>, vector<4x16xf32>,
    %cst = arith.constant 0.000000e+00 : f32
    %7 = vector.broadcast %cst : f32 to vector<32x1xf32>
    %c0_9 = arith.constant 0 : index
    %c0_10 = arith.constant 0 : index
    %8 = vector.load %arg16[%c0_9, %c0_10] : memref<32x34xf32, #tpu.memory_space<vmem>>, vector<32x1xf32>
    tpu.vector_store %arg16[%c0_9, %c0_10], %7 {strides = array<i32>} : memref<32x34xf32, #tpu.memory_space<vmem>>, vector<32x1xf32>,
    %cst_11 = arith.constant 0.000000e+00 : f32
    %9 = vector.broadcast %cst_11 : f32 to vector<4x32xf32>
    %c4 = arith.constant 4 : index
    %c0_12 = arith.constant 0 : index
    %10 = vector.load %arg15[%c4, %c0_12] : memref<32x32xf32, #tpu.memory_space<vmem>>, vector<4x32xf32>
    tpu.vector_store %arg15[%c4, %c0_12], %9 {strides = array<i32>} : memref<32x32xf32, #tpu.memory_space<vmem>>, vector<4x32xf32>,
    %cst_13 = arith.constant 0.000000e+00 : f32
    %11 = vector.broadcast %cst_13 : f32 to vector<4x32xf32>
    %c12 = arith.constant 12 : index
    %c0_14 = arith.constant 0 : index
    %12 = vector.load %arg15[%c12, %c0_14] : memref<32x32xf32, #tpu.memory_space<vmem>>, vector<4x32xf32>
    tpu.vector_store %arg15[%c12, %c0_14], %11 {strides = array<i32>} : memref<32x32xf32, #tpu.memory_space<vmem>>, vector<4x32xf32>,
    %cst_15 = arith.constant 0.000000e+00 : f32
    %13 = vector.broadcast %cst_15 : f32 to vector<4x32xf32>
    %c20 = arith.constant 20 : index
    %c0_16 = arith.constant 0 : index
    %14 = vector.load %arg15[%c20, %c0_16] : memref<32x32xf32, #tpu.memory_space<vmem>>, vector<4x32xf32>
    tpu.vector_store %arg15[%c20, %c0_16], %13 {strides = array<i32>} : memref<32x32xf32, #tpu.memory_space<vmem>>, vector<4x32xf32>,
    %cst_17 = arith.constant 0.000000e+00 : f32
    %15 = vector.broadcast %cst_17 : f32 to vector<4x32xf32>
    %c28 = arith.constant 28 : index
    %c0_18 = arith.constant 0 : index
    %16 = vector.load %arg15[%c28, %c0_18] : memref<32x32xf32, #tpu.memory_space<vmem>>, vector<4x32xf32>
    tpu.vector_store %arg15[%c28, %c0_18], %15 {strides = array<i32>} : memref<32x32xf32, #tpu.memory_space<vmem>>, vector<4x32xf32>,
    %c0_19 = arith.constant 0 : index
    %c0_20 = arith.constant 0 : index
    %17 = vector.load %arg14[%c0_19, %c0_20] : memref<4x36xf32, #tpu.memory_space<vmem>>, vector<4x32xf32>
    %c0_21 = arith.constant 0 : index
    %c0_22 = arith.constant 0 : index
    %18 = memref.load %arg3[%c0_21, %c0_22] : memref<4x4xf32, #tpu.memory_space<smem>>
    %19 = vector.broadcast %18 : f32 to vector<4x32xf32>
    %20 = arith.mulf %17, %19 : vector<4x32xf32>
    %c1_23 = arith.constant 1 : index
    %c0_24 = arith.constant 0 : index
    %21 = memref.load %arg3[%c1_23, %c0_24] : memref<4x4xf32, #tpu.memory_space<smem>>
    %22 = vector.broadcast %21 : f32 to vector<4x32xf32>
    %23 = arith.mulf %17, %22 : vector<4x32xf32>
    %c2 = arith.constant 2 : index
    %c0_25 = arith.constant 0 : index
    %24 = memref.load %arg3[%c2, %c0_25] : memref<4x4xf32, #tpu.memory_space<smem>>
    %25 = vector.broadcast %24 : f32 to vector<4x32xf32>
    %26 = arith.mulf %17, %25 : vector<4x32xf32>
    %c3 = arith.constant 3 : index
    %c0_26 = arith.constant 0 : index
    %27 = memref.load %arg3[%c3, %c0_26] : memref<4x4xf32, #tpu.memory_space<smem>>
    %28 = vector.broadcast %27 : f32 to vector<4x32xf32>
    %29 = arith.mulf %17, %28 : vector<4x32xf32>
    %c0_27 = arith.constant 0 : index
    %c1_28 = arith.constant 1 : index
    %30 = vector.load %arg14[%c0_27, %c1_28] : memref<4x36xf32, #tpu.memory_space<vmem>>, vector<4x32xf32>
    %c0_29 = arith.constant 0 : index
    %c1_30 = arith.constant 1 : index
    %31 = memref.load %arg3[%c0_29, %c1_30] : memref<4x4xf32, #tpu.memory_space<smem>>
    %32 = vector.broadcast %31 : f32 to vector<4x32xf32>
    %33 = arith.mulf %30, %32 : vector<4x32xf32>
    %34 = arith.addf %20, %33 : vector<4x32xf32>
    %c1_31 = arith.constant 1 : index
    %c1_32 = arith.constant 1 : index
    %35 = memref.load %arg3[%c1_31, %c1_32] : memref<4x4xf32, #tpu.memory_space<smem>>
    %36 = vector.broadcast %35 : f32 to vector<4x32xf32>
    %37 = arith.mulf %30, %36 : vector<4x32xf32>
    %38 = arith.addf %23, %37 : vector<4x32xf32>
    %c2_33 = arith.constant 2 : index
    %c1_34 = arith.constant 1 : index
    %39 = memref.load %arg3[%c2_33, %c1_34] : memref<4x4xf32, #tpu.memory_space<smem>>
    %40 = vector.broadcast %39 : f32 to vector<4x32xf32>
    %41 = arith.mulf %30, %40 : vector<4x32xf32>
    %42 = arith.addf %26, %41 : vector<4x32xf32>
    %c3_35 = arith.constant 3 : index
    %c1_36 = arith.constant 1 : index
    %43 = memref.load %arg3[%c3_35, %c1_36] : memref<4x4xf32, #tpu.memory_space<smem>>
    %44 = vector.broadcast %43 : f32 to vector<4x32xf32>
    %45 = arith.mulf %30, %44 : vector<4x32xf32>
    %46 = arith.addf %29, %45 : vector<4x32xf32>
    %c0_37 = arith.constant 0 : index
    %c2_38 = arith.constant 2 : index
    %47 = vector.load %arg14[%c0_37, %c2_38] : memref<4x36xf32, #tpu.memory_space<vmem>>, vector<4x32xf32>
    %c0_39 = arith.constant 0 : index
    %c2_40 = arith.constant 2 : index
    %48 = memref.load %arg3[%c0_39, %c2_40] : memref<4x4xf32, #tpu.memory_space<smem>>
    %49 = vector.broadcast %48 : f32 to vector<4x32xf32>
    %50 = arith.mulf %47, %49 : vector<4x32xf32>
    %51 = arith.addf %34, %50 : vector<4x32xf32>
    %c1_41 = arith.constant 1 : index
    %c2_42 = arith.constant 2 : index
    %52 = memref.load %arg3[%c1_41, %c2_42] : memref<4x4xf32, #tpu.memory_space<smem>>
    %53 = vector.broadcast %52 : f32 to vector<4x32xf32>
    %54 = arith.mulf %47, %53 : vector<4x32xf32>
    %55 = arith.addf %38, %54 : vector<4x32xf32>
    %c2_43 = arith.constant 2 : index
    %c2_44 = arith.constant 2 : index
    %56 = memref.load %arg3[%c2_43, %c2_44] : memref<4x4xf32, #tpu.memory_space<smem>>
    %57 = vector.broadcast %56 : f32 to vector<4x32xf32>
    %58 = arith.mulf %47, %57 : vector<4x32xf32>
    %59 = arith.addf %42, %58 : vector<4x32xf32>
    %c3_45 = arith.constant 3 : index
    %c2_46 = arith.constant 2 : index
    %60 = memref.load %arg3[%c3_45, %c2_46] : memref<4x4xf32, #tpu.memory_space<smem>>
    %61 = vector.broadcast %60 : f32 to vector<4x32xf32>
    %62 = arith.mulf %47, %61 : vector<4x32xf32>
    %63 = arith.addf %46, %62 : vector<4x32xf32>
    %c0_47 = arith.constant 0 : index
    %c3_48 = arith.constant 3 : index
    %64 = vector.load %arg14[%c0_47, %c3_48] : memref<4x36xf32, #tpu.memory_space<vmem>>, vector<4x32xf32>
    %c0_49 = arith.constant 0 : index
    %c3_50 = arith.constant 3 : index
    %65 = memref.load %arg3[%c0_49, %c3_50] : memref<4x4xf32, #tpu.memory_space<smem>>
    %66 = vector.broadcast %65 : f32 to vector<4x32xf32>
    %67 = arith.mulf %64, %66 : vector<4x32xf32>
    %68 = arith.addf %51, %67 : vector<4x32xf32>
    %c1_51 = arith.constant 1 : index
    %c3_52 = arith.constant 3 : index
    %69 = memref.load %arg3[%c1_51, %c3_52] : memref<4x4xf32, #tpu.memory_space<smem>>
    %70 = vector.broadcast %69 : f32 to vector<4x32xf32>
    %71 = arith.mulf %64, %70 : vector<4x32xf32>
    %72 = arith.addf %55, %71 : vector<4x32xf32>
    %c2_53 = arith.constant 2 : index
    %c3_54 = arith.constant 3 : index
    %73 = memref.load %arg3[%c2_53, %c3_54] : memref<4x4xf32, #tpu.memory_space<smem>>
    %74 = vector.broadcast %73 : f32 to vector<4x32xf32>
    %75 = arith.mulf %64, %74 : vector<4x32xf32>
    %76 = arith.addf %59, %75 : vector<4x32xf32>
    %c3_55 = arith.constant 3 : index
    %c3_56 = arith.constant 3 : index
    %77 = memref.load %arg3[%c3_55, %c3_56] : memref<4x4xf32, #tpu.memory_space<smem>>
    %78 = vector.broadcast %77 : f32 to vector<4x32xf32>
    %79 = arith.mulf %64, %78 : vector<4x32xf32>
    %80 = arith.addf %63, %79 : vector<4x32xf32>
    %c0_57 = arith.constant 0 : index
    %81 = memref.load %arg4[%c0_57] : memref<4xf32, #tpu.memory_space<smem>>
    %82 = vector.broadcast %81 : f32 to vector<4x32xf32>
    %83 = arith.addf %68, %82 : vector<4x32xf32>
    %cst_58 = arith.constant 0.000000e+00 : f32
    %84 = vector.broadcast %cst_58 : f32 to vector<4x32xf32>
    %85 = arith.cmpf ogt, %83, %84 : vector<4x32xf32>
    %86 = math.exp %83 : vector<4x32xf32>
    %cst_59 = arith.constant 1.000000e+00 : f32
    %87 = vector.broadcast %cst_59 : f32 to vector<4x32xf32>
    %88 = arith.subf %86, %87 : vector<4x32xf32>
    %89 = arith.select %85, %83, %88 : vector<4x32xi1>, vector<4x32xf32>
    %c0_60 = arith.constant 0 : index
    %c0_61 = arith.constant 0 : index
    %90 = vector.load %arg15[%c0_60, %c0_61] : memref<32x32xf32, #tpu.memory_space<vmem>>, vector<4x32xf32>
    tpu.vector_store %arg15[%c0_60, %c0_61], %89 {strides = array<i32>} : memref<32x32xf32, #tpu.memory_space<vmem>>, vector<4x32xf32>,
    %c1_62 = arith.constant 1 : index
    %91 = memref.load %arg4[%c1_62] : memref<4xf32, #tpu.memory_space<smem>>
    %92 = vector.broadcast %91 : f32 to vector<4x32xf32>
    %93 = arith.addf %72, %92 : vector<4x32xf32>
    %cst_63 = arith.constant 0.000000e+00 : f32
    %94 = vector.broadcast %cst_63 : f32 to vector<4x32xf32>
    %95 = arith.cmpf ogt, %93, %94 : vector<4x32xf32>
    %96 = math.exp %93 : vector<4x32xf32>
    %cst_64 = arith.constant 1.000000e+00 : f32
    %97 = vector.broadcast %cst_64 : f32 to vector<4x32xf32>
    %98 = arith.subf %96, %97 : vector<4x32xf32>
    %99 = arith.select %95, %93, %98 : vector<4x32xi1>, vector<4x32xf32>
    %c8 = arith.constant 8 : index
    %c0_65 = arith.constant 0 : index
    %100 = vector.load %arg15[%c8, %c0_65] : memref<32x32xf32, #tpu.memory_space<vmem>>, vector<4x32xf32>
    tpu.vector_store %arg15[%c8, %c0_65], %99 {strides = array<i32>} : memref<32x32xf32, #tpu.memory_space<vmem>>, vector<4x32xf32>,
    %c2_66 = arith.constant 2 : index
    %101 = memref.load %arg4[%c2_66] : memref<4xf32, #tpu.memory_space<smem>>
    %102 = vector.broadcast %101 : f32 to vector<4x32xf32>
    %103 = arith.addf %76, %102 : vector<4x32xf32>
    %cst_67 = arith.constant 0.000000e+00 : f32
    %104 = vector.broadcast %cst_67 : f32 to vector<4x32xf32>
    %105 = arith.cmpf ogt, %103, %104 : vector<4x32xf32>
    %106 = math.exp %103 : vector<4x32xf32>
    %cst_68 = arith.constant 1.000000e+00 : f32
    %107 = vector.broadcast %cst_68 : f32 to vector<4x32xf32>
    %108 = arith.subf %106, %107 : vector<4x32xf32>
    %109 = arith.select %105, %103, %108 : vector<4x32xi1>, vector<4x32xf32>
    %c16_69 = arith.constant 16 : index
    %c0_70 = arith.constant 0 : index
    %110 = vector.load %arg15[%c16_69, %c0_70] : memref<32x32xf32, #tpu.memory_space<vmem>>, vector<4x32xf32>
    tpu.vector_store %arg15[%c16_69, %c0_70], %109 {strides = array<i32>} : memref<32x32xf32, #tpu.memory_space<vmem>>, vector<4x32xf32>,
    %c3_71 = arith.constant 3 : index
    %111 = memref.load %arg4[%c3_71] : memref<4xf32, #tpu.memory_space<smem>>
    %112 = vector.broadcast %111 : f32 to vector<4x32xf32>
    %113 = arith.addf %80, %112 : vector<4x32xf32>
    %cst_72 = arith.constant 0.000000e+00 : f32
    %114 = vector.broadcast %cst_72 : f32 to vector<4x32xf32>
    %115 = arith.cmpf ogt, %113, %114 : vector<4x32xf32>
    %116 = math.exp %113 : vector<4x32xf32>
    %cst_73 = arith.constant 1.000000e+00 : f32
    %117 = vector.broadcast %cst_73 : f32 to vector<4x32xf32>
    %118 = arith.subf %116, %117 : vector<4x32xf32>
    %119 = arith.select %115, %113, %118 : vector<4x32xi1>, vector<4x32xf32>
    %c24 = arith.constant 24 : index
    %c0_74 = arith.constant 0 : index
    %120 = vector.load %arg15[%c24, %c0_74] : memref<32x32xf32, #tpu.memory_space<vmem>>, vector<4x32xf32>
    tpu.vector_store %arg15[%c24, %c0_74], %119 {strides = array<i32>} : memref<32x32xf32, #tpu.memory_space<vmem>>, vector<4x32xf32>,
    %c0_75 = arith.constant 0 : index
    %c0_76 = arith.constant 0 : index
    %121 = vector.load %arg5[%c0_75, %c0_76] : memref<16x32xf32, #tpu.memory_space<vmem>>, vector<16x32xf32>
    %c0_77 = arith.constant 0 : index
    %c0_78 = arith.constant 0 : index
    %122 = vector.load %arg15[%c0_77, %c0_78] : memref<32x32xf32, #tpu.memory_space<vmem>>, vector<32x32xf32>
    %cst_79 = arith.constant dense<0.000000e+00> : vector<16x32xf32>
    %123 = tpu.matmul %121, %122, %cst_79 {dimension_numbers = #tpu.dot_dimension_numbers<[1], [0], [0], [1], [0, 0, 1, 1], [], []>} : vector<16x32xf32>, vector<32x32xf32>, vector<16x32xf32> -> vector<16x32xf32>
    %c0_80 = arith.constant 0 : index
    %c0_81 = arith.constant 0 : index
    %124 = vector.load %arg6[%c0_80, %c0_81] : memref<16x1xf32, #tpu.memory_space<vmem>>, vector<16x1xf32>
    %125 = vector.broadcast %124 : vector<16x1xf32> to vector<16x32xf32>
    %126 = arith.addf %123, %125 : vector<16x32xf32>
    %cst_82 = arith.constant 0.000000e+00 : f32
    %127 = vector.broadcast %cst_82 : f32 to vector<16x32xf32>
    %128 = arith.cmpf ogt, %126, %127 : vector<16x32xf32>
    %129 = math.exp %126 : vector<16x32xf32>
    %cst_83 = arith.constant 1.000000e+00 : f32
    %130 = vector.broadcast %cst_83 : f32 to vector<16x32xf32>
    %131 = arith.subf %129, %130 : vector<16x32xf32>
    %132 = arith.select %128, %126, %131 : vector<16x32xi1>, vector<16x32xf32>
    %c13_i32 = arith.constant 13 : i32
    %133 = vector.broadcast %c13_i32 : i32 to vector<1x32xi32>
    %134 = arith.cmpi slt, %0, %133 : vector<1x32xi32>
    %cst_84 = arith.constant 0.000000e+00 : f32
    %135 = vector.shape_cast %134 : vector<1x32xi1> to vector<1x32xi1>
    %136 = vector.broadcast %135 : vector<1x32xi1> to vector<16x32xi1>
    %137 = vector.broadcast %cst_84 : f32 to vector<16x32xf32>
    %138 = arith.select %136, %132, %137 : vector<16x32xi1>, vector<16x32xf32>
    %c0_85 = arith.constant 0 : index
    %c1_86 = arith.constant 1 : index
    %139 = vector.load %arg16[%c0_85, %c1_86] : memref<32x34xf32, #tpu.memory_space<vmem>>, vector<16x32xf32>
    tpu.vector_store %arg16[%c0_85, %c1_86], %138 {strides = array<i32>} : memref<32x34xf32, #tpu.memory_space<vmem>>, vector<16x32xf32>,
    %c0_87 = arith.constant 0 : index
    %c0_88 = arith.constant 0 : index
    %140 = vector.load %arg16[%c0_87, %c0_88] : memref<32x34xf32, #tpu.memory_space<vmem>>, vector<16x32xf32>
    %c0_89 = arith.constant 0 : index
    %c0_90 = arith.constant 0 : index
    %141 = vector.load %arg7[%c0_89, %c0_90] : memref<16x3xf32, #tpu.memory_space<vmem>>, vector<16x1xf32>
    %142 = vector.broadcast %141 : vector<16x1xf32> to vector<16x32xf32>
    %143 = arith.mulf %142, %140 : vector<16x32xf32>
    %c0_91 = arith.constant 0 : index
    %c1_92 = arith.constant 1 : index
    %144 = vector.load %arg16[%c0_91, %c1_92] : memref<32x34xf32, #tpu.memory_space<vmem>>, vector<16x32xf32>
    %c0_93 = arith.constant 0 : index
    %c1_94 = arith.constant 1 : index
    %145 = vector.load %arg7[%c0_93, %c1_94] : memref<16x3xf32, #tpu.memory_space<vmem>>, vector<16x1xf32>
    %146 = vector.broadcast %145 : vector<16x1xf32> to vector<16x32xf32>
    %147 = arith.mulf %146, %144 : vector<16x32xf32>
    %148 = arith.addf %143, %147 : vector<16x32xf32>
    %c0_95 = arith.constant 0 : index
    %c2_96 = arith.constant 2 : index
    %149 = vector.load %arg16[%c0_95, %c2_96] : memref<32x34xf32, #tpu.memory_space<vmem>>, vector<16x32xf32>
    %c0_97 = arith.constant 0 : index
    %c2_98 = arith.constant 2 : index
    %150 = vector.load %arg7[%c0_97, %c2_98] : memref<16x3xf32, #tpu.memory_space<vmem>>, vector<16x1xf32>
    %151 = vector.broadcast %150 : vector<16x1xf32> to vector<16x32xf32>
    %152 = arith.mulf %151, %149 : vector<16x32xf32>
    %153 = arith.addf %148, %152 : vector<16x32xf32>
    %c0_99 = arith.constant 0 : index
    %c0_100 = arith.constant 0 : index
    %154 = vector.load %arg8[%c0_99, %c0_100] : memref<32x16xf32, #tpu.memory_space<vmem>>, vector<32x16xf32>
    %cst_101 = arith.constant dense<0.000000e+00> : vector<32x32xf32>
    %155 = tpu.matmul %154, %153, %cst_101 {dimension_numbers = #tpu.dot_dimension_numbers<[1], [0], [0], [1], [0, 0, 1, 1], [], []>} : vector<32x16xf32>, vector<16x32xf32>, vector<32x32xf32> -> vector<32x32xf32>
    %c0_102 = arith.constant 0 : index
    %c0_103 = arith.constant 0 : index
    %156 = vector.load %arg9[%c0_102, %c0_103] : memref<32x1xf32, #tpu.memory_space<vmem>>, vector<32x1xf32>
    %157 = vector.broadcast %156 : vector<32x1xf32> to vector<32x32xf32>
    %158 = arith.addf %155, %157 : vector<32x32xf32>
    %cst_104 = arith.constant 0.000000e+00 : f32
    %159 = vector.broadcast %cst_104 : f32 to vector<32x32xf32>
    %160 = arith.cmpf ogt, %158, %159 : vector<32x32xf32>
    %161 = math.exp %158 : vector<32x32xf32>
    %cst_105 = arith.constant 1.000000e+00 : f32
    %162 = vector.broadcast %cst_105 : f32 to vector<32x32xf32>
    %163 = arith.subf %161, %162 : vector<32x32xf32>
    %164 = arith.select %160, %158, %163 : vector<32x32xi1>, vector<32x32xf32>
    %c13_i32_106 = arith.constant 13 : i32
    %165 = vector.broadcast %c13_i32_106 : i32 to vector<1x32xi32>
    %166 = arith.cmpi slt, %0, %165 : vector<1x32xi32>
    %cst_107 = arith.constant 0.000000e+00 : f32
    %167 = vector.shape_cast %166 : vector<1x32xi1> to vector<1x32xi1>
    %168 = vector.broadcast %167 : vector<1x32xi1> to vector<32x32xi1>
    %169 = vector.broadcast %cst_107 : f32 to vector<32x32xf32>
    %170 = arith.select %168, %164, %169 : vector<32x32xi1>, vector<32x32xf32>
    %c0_108 = arith.constant 0 : index
    %c1_109 = arith.constant 1 : index
    %171 = vector.load %arg16[%c0_108, %c1_109] : memref<32x34xf32, #tpu.memory_space<vmem>>, vector<32x32xf32>
    tpu.vector_store %arg16[%c0_108, %c1_109], %170 {strides = array<i32>} : memref<32x34xf32, #tpu.memory_space<vmem>>, vector<32x32xf32>,
    %c0_110 = arith.constant 0 : index
    %c0_111 = arith.constant 0 : index
    %172 = vector.load %arg16[%c0_110, %c0_111] : memref<32x34xf32, #tpu.memory_space<vmem>>, vector<32x32xf32>
    %c0_112 = arith.constant 0 : index
    %c0_113 = arith.constant 0 : index
    %173 = vector.load %arg10[%c0_112, %c0_113] : memref<32x3xf32, #tpu.memory_space<vmem>>, vector<32x1xf32>
    %174 = vector.broadcast %173 : vector<32x1xf32> to vector<32x32xf32>
    %175 = arith.mulf %174, %172 : vector<32x32xf32>
    %c0_114 = arith.constant 0 : index
    %c1_115 = arith.constant 1 : index
    %176 = vector.load %arg16[%c0_114, %c1_115] : memref<32x34xf32, #tpu.memory_space<vmem>>, vector<32x32xf32>
    %c0_116 = arith.constant 0 : index
    %c1_117 = arith.constant 1 : index
    %177 = vector.load %arg10[%c0_116, %c1_117] : memref<32x3xf32, #tpu.memory_space<vmem>>, vector<32x1xf32>
    %178 = vector.broadcast %177 : vector<32x1xf32> to vector<32x32xf32>
    %179 = arith.mulf %178, %176 : vector<32x32xf32>
    %180 = arith.addf %175, %179 : vector<32x32xf32>
    %c0_118 = arith.constant 0 : index
    %c2_119 = arith.constant 2 : index
    %181 = vector.load %arg16[%c0_118, %c2_119] : memref<32x34xf32, #tpu.memory_space<vmem>>, vector<32x32xf32>
    %c0_120 = arith.constant 0 : index
    %c2_121 = arith.constant 2 : index
    %182 = vector.load %arg10[%c0_120, %c2_121] : memref<32x3xf32, #tpu.memory_space<vmem>>, vector<32x1xf32>
    %183 = vector.broadcast %182 : vector<32x1xf32> to vector<32x32xf32>
    %184 = arith.mulf %183, %181 : vector<32x32xf32>
    %185 = arith.addf %180, %184 : vector<32x32xf32>
    %c0_122 = arith.constant 0 : index
    %c0_123 = arith.constant 0 : index
    %186 = vector.load %arg11[%c0_122, %c0_123] : memref<32x32xf32, #tpu.memory_space<vmem>>, vector<32x32xf32>
    %cst_124 = arith.constant dense<0.000000e+00> : vector<32x32xf32>
    %187 = tpu.matmul %186, %185, %cst_124 {dimension_numbers = #tpu.dot_dimension_numbers<[1], [0], [0], [1], [0, 0, 1, 1], [], []>} : vector<32x32xf32>, vector<32x32xf32>, vector<32x32xf32> -> vector<32x32xf32>
    %c0_125 = arith.constant 0 : index
    %c0_126 = arith.constant 0 : index
    %188 = vector.load %arg12[%c0_125, %c0_126] : memref<32x1xf32, #tpu.memory_space<vmem>>, vector<32x1xf32>
    %189 = vector.broadcast %188 : vector<32x1xf32> to vector<32x32xf32>
    %190 = arith.addf %187, %189 : vector<32x32xf32>
    %cst_127 = arith.constant 0.000000e+00 : f32
    %191 = vector.broadcast %cst_127 : f32 to vector<32x32xf32>
    %192 = arith.cmpf ogt, %190, %191 : vector<32x32xf32>
    %193 = math.exp %190 : vector<32x32xf32>
    %cst_128 = arith.constant 1.000000e+00 : f32
    %194 = vector.broadcast %cst_128 : f32 to vector<32x32xf32>
    %195 = arith.subf %193, %194 : vector<32x32xf32>
    %196 = arith.select %192, %190, %195 : vector<32x32xi1>, vector<32x32xf32>
    %197 = vector.extract_strided_slice %196 {offsets = [0, 0], sizes = [32, 13], strides = [1, 1]} : vector<32x32xf32> to vector<32x13xf32>
    %cst_129 = arith.constant dense<0xFF800000> : vector<32xf32>
    %198 = vector.multi_reduction <maximumf>, %197, %cst_129 [1] : vector<32x13xf32> to vector<32xf32>
    %c0_130 = arith.constant 0 : index
    %c0_131 = arith.constant 0 : index
    %199 = vector.load %arg13[%c0_130, %c0_131] : memref<2x32xf32, #tpu.memory_space<vmem>>, vector<1x32xf32>
    %200 = vector.shape_cast %199 : vector<1x32xf32> to vector<32xf32>
    %201 = vector.shape_cast %198 : vector<32xf32> to vector<1x32xf32>
    tpu.vector_store %arg13[%c0_130, %c0_131], %201 {strides = array<i32>} : memref<2x32xf32, #tpu.memory_space<vmem>>, vector<1x32xf32>,
    %202 = vector.extract_strided_slice %196 {offsets = [0, 16], sizes = [32, 13], strides = [1, 1]} : vector<32x32xf32> to vector<32x13xf32>
    %cst_132 = arith.constant dense<0xFF800000> : vector<32xf32>
    %203 = vector.multi_reduction <maximumf>, %202, %cst_132 [1] : vector<32x13xf32> to vector<32xf32>
    %c1_133 = arith.constant 1 : index
    %c0_134 = arith.constant 0 : index
    %204 = vector.load %arg13[%c1_133, %c0_134] : memref<2x32xf32, #tpu.memory_space<vmem>>, vector<1x32xf32>
    %205 = vector.shape_cast %204 : vector<1x32xf32> to vector<32xf32>
    %206 = vector.shape_cast %203 : vector<32xf32> to vector<1x32xf32>
    tpu.vector_store %arg13[%c1_133, %c0_134], %206 {strides = array<i32>} : memref<2x32xf32, #tpu.memory_space<vmem>>, vector<1x32xf32>,
    return
  }
  func.func @transform_0(%arg0: i32) -> (i32, i32) {
    %c0_i32 = arith.constant 0 : i32
    %c0_i32_0 = arith.constant 0 : i32
    %c0_i32_1 = arith.constant 0 : i32
    return %c0_i32, %c0_i32_0 : i32, i32
  }
  func.func @transform_1(%arg0: i32) -> (i32, i32, i32) {
    %c0_i32 = arith.constant 0 : i32
    %c0_i32_0 = arith.constant 0 : i32
    %c0_i32_1 = arith.constant 0 : i32
    return %arg0, %c0_i32, %c0_i32_0 : i32, i32, i32
  }
  func.func @transform_2(%arg0: i32) -> (i32, i32) {
    %c0_i32 = arith.constant 0 : i32
    %c0_i32_0 = arith.constant 0 : i32
    %c0_i32_1 = arith.constant 0 : i32
    return %c0_i32, %c0_i32_0 : i32, i32
  }
  func.func @transform_3(%arg0: i32) -> i32 {
    %c0_i32 = arith.constant 0 : i32
    %c0_i32_0 = arith.constant 0 : i32
    return %c0_i32 : i32
  }
  func.func @transform_4(%arg0: i32) -> (i32, i32) {
    %c0_i32 = arith.constant 0 : i32
    %c0_i32_0 = arith.constant 0 : i32
    %c0_i32_1 = arith.constant 0 : i32
    return %c0_i32, %c0_i32_0 : i32, i32
  }
  func.func @transform_5(%arg0: i32) -> (i32, i32) {
    %c0_i32 = arith.constant 0 : i32
    %c0_i32_0 = arith.constant 0 : i32
    %c0_i32_1 = arith.constant 0 : i32
    return %c0_i32, %c0_i32_0 : i32, i32
  }
  func.func @transform_6(%arg0: i32) -> (i32, i32) {
    %c0_i32 = arith.constant 0 : i32
    %c0_i32_0 = arith.constant 0 : i32
    %c0_i32_1 = arith.constant 0 : i32
    return %c0_i32, %c0_i32_0 : i32, i32
  }
  func.func @transform_7(%arg0: i32) -> (i32, i32) {
    %c0_i32 = arith.constant 0 : i32
    %c0_i32_0 = arith.constant 0 : i32
    %c0_i32_1 = arith.constant 0 : i32
    return %c0_i32, %c0_i32_0 : i32, i32
  }
  func.func @transform_8(%arg0: i32) -> (i32, i32) {
    %c0_i32 = arith.constant 0 : i32
    %c0_i32_0 = arith.constant 0 : i32
    %c0_i32_1 = arith.constant 0 : i32
    return %c0_i32, %c0_i32_0 : i32, i32
  }
  func.func @transform_9(%arg0: i32) -> (i32, i32) {
    %c0_i32 = arith.constant 0 : i32
    %c0_i32_0 = arith.constant 0 : i32
    %c0_i32_1 = arith.constant 0 : i32
    return %c0_i32, %c0_i32_0 : i32, i32
  }
  func.func @transform_10(%arg0: i32) -> (i32, i32) {
    %c0_i32 = arith.constant 0 : i32
    %c0_i32_0 = arith.constant 0 : i32
    %c0_i32_1 = arith.constant 0 : i32
    return %c0_i32, %c0_i32_0 : i32, i32
  }
  func.func @transform_11(%arg0: i32) -> (i32, i32) {
    %c0_i32 = arith.constant 0 : i32
    %c0_i32_0 = arith.constant 0 : i32
    %c0_i32_1 = arith.constant 0 : i32
    return %c0_i32, %c0_i32_0 : i32, i32
  }
  func.func @transform_12(%arg0: i32) -> (i32, i32) {
    %c0_i32 = arith.constant 0 : i32
    %c0_i32_0 = arith.constant 0 : i32
    return %arg0, %c0_i32 : i32, i32
  }
}

</mosaic_0001>

<llo_original>
// kernel: tpu_custom_call.1
$region0: #{tpu_custom_call.1}
  #allocation0 [shape = 'u32[]', space=smem, size = 0x4, offset = 0x4, fixed_abs, tag = 'smem constant byte address 0x4 - core index']
  #allocation1 [shape = 'u32[72,128]{1,0:T(1,128)}', space=vmem, size = 0x9000, scoped, tag = 'internal scratch']
  #allocation2 [shape = 'f32[4,36]{1,0:T(4,128)}', space=vmem, size = 0x800, scoped, tag = 'scratch operand']
  #allocation3 [shape = 'f32[32,32]{1,0:T(8,128)}', space=vmem, size = 0x4000, scoped, tag = 'scratch operand']
  #allocation4 [shape = 'f32[32,34]{1,0:T(8,128)}', space=vmem, size = 0x4000, scoped, tag = 'scratch operand']
  %s0 = inlined_call_operand.vmem [shape: s32[1,32], index: 0, kind: input, shape index: {}]
  %s1 = inlined_call_operand.vmem [shape: f32[2,4,16], index: 1, kind: input, shape index: {}]
  %s2 = inlined_call_operand.vmem [shape: f32[4,4], index: 2, kind: input, shape index: {}]
  %s3 = inlined_call_operand.vmem [shape: f32[4], index: 3, kind: input, shape index: {}]
  %s4 = inlined_call_operand.vmem [shape: f32[16,32], index: 4, kind: input, shape index: {}]
  %s5 = inlined_call_operand.vmem [shape: f32[16,1], index: 5, kind: input, shape index: {}]
  %s6 = inlined_call_operand.vmem [shape: f32[16,3], index: 6, kind: input, shape index: {}]
  %s7 = inlined_call_operand.vmem [shape: f32[32,16], index: 7, kind: input, shape index: {}]
  %s8 = inlined_call_operand.vmem [shape: f32[32,1], index: 8, kind: input, shape index: {}]
  %s9 = inlined_call_operand.vmem [shape: f32[32,3], index: 9, kind: input, shape index: {}]
  %s10 = inlined_call_operand.vmem [shape: f32[32,32], index: 10, kind: input, shape index: {}]
  %s11 = inlined_call_operand.vmem [shape: f32[32,1], index: 11, kind: input, shape index: {}]
  %s12 = inlined_call_operand.hbm [shape: f32[2,32], index: 12, kind: output, shape index: {}]
  %s13 = sld [smem:[#allocation0]]
  $region66: #{tpu_custom_call.1} parent=0
    _
  %s15 = ssub.s32 1, %s13
  %s16 = scalar_select 0, %s15, %s13
  $region1: #{tpu_custom_call.1} parent=0
    #allocation5 [shape = 'u8[2048]{0}', space=smem, size = 0x800, scoped, tag = 'input window, operand 2, single buffered']
    #allocation6 [shape = 's32[1]{0}', space=sflag, size = 0x4, scoped, tag = 'scoped memory for tpu_custom_call.1']
    #allocation7 [shape = 's32[1]{0}', space=sflag, size = 0x4, scoped, tag = 'scoped memory for tpu_custom_call.1']
    #allocation8 [shape = 'u8[512]{0}', space=smem, size = 0x200, scoped, tag = 'input window, operand 3, single buffered']
    #allocation9 [shape = 's32[1]{0}', space=sflag, size = 0x4, scoped, tag = 'scoped memory for tpu_custom_call.1']
    #allocation10 [shape = 'u8[1024]{0}', space=vmem, size = 0x400, scoped, tag = 'output window, operand 0, single buffered']
    %17 = vsyncpa [#allocation7], 0
    %18 = vsyncpa [#allocation9], 0
    %19 = vsyncpa [#allocation6], 0
    // Predicated region
    $region2: #{tpu_custom_call.1} parent=1 // pred_check
      _
    $region3: #{tpu_custom_call.1} parent=1 // pred_check_branch
      %21 = sbr.rel (0) target = $region5
    $region4: #{tpu_custom_call.1} parent=1 // pred_region
      _
    $region5: #{tpu_custom_call.1} parent=1 // pred_fallthru
      _
    // Predicated region
    $region6: #{tpu_custom_call.1} parent=1 // pred_check
      _
    $region7: #{tpu_custom_call.1} parent=1 // pred_check_branch
      %23 = sbr.rel (0) target = $region9
    $region8: #{tpu_custom_call.1} parent=1 // pred_region
      _
    $region9: #{tpu_custom_call.1} parent=1 // pred_fallthru
      _
    // Predicated region
    $region10: #{tpu_custom_call.1} parent=1 // pred_check
      _
    $region11: #{tpu_custom_call.1} parent=1 // pred_check_branch
      %25 = sbr.rel (0) target = $region13
    $region12: #{tpu_custom_call.1} parent=1 // pred_region
      %27 = vsyncadd [#allocation7], 0
      %s29 = sshll.u32 %s2, 4
      %s30 = int_to_ptr.vmem [resolvable:$true] %s29
      %32 = dma.vmem_to_smem %s30, 64, [#allocation5], [#allocation7]
    $region13: #{tpu_custom_call.1} parent=1 // pred_fallthru
      _
    // Predicated region
    $region14: #{tpu_custom_call.1} parent=1 // pred_check
      _
    $region15: #{tpu_custom_call.1} parent=1 // pred_check_branch
      %34 = sbr.rel (0) target = $region17
    $region16: #{tpu_custom_call.1} parent=1 // pred_region
      %36 = vsyncadd [#allocation9], 0
      %s38 = sshll.u32 %s3, 4
      %s39 = int_to_ptr.vmem [resolvable:$true] %s38
      %41 = dma.vmem_to_smem %s39, 16, [#allocation8], [#allocation9]
    $region17: #{tpu_custom_call.1} parent=1 // pred_fallthru
      _
    // Predicated region
    $region18: #{tpu_custom_call.1} parent=1 // pred_check
      _
    $region19: #{tpu_custom_call.1} parent=1 // pred_check_branch
      %43 = sbr.rel (0) target = $region21
    $region20: #{tpu_custom_call.1} parent=1 // pred_region
      _
    $region21: #{tpu_custom_call.1} parent=1 // pred_fallthru
      _
    // Predicated region
    $region22: #{tpu_custom_call.1} parent=1 // pred_check
      _
    $region23: #{tpu_custom_call.1} parent=1 // pred_check_branch
      %45 = sbr.rel (0) target = $region25
    $region24: #{tpu_custom_call.1} parent=1 // pred_region
      _
    $region25: #{tpu_custom_call.1} parent=1 // pred_fallthru
      _
    // Predicated region
    $region26: #{tpu_custom_call.1} parent=1 // pred_check
      _
    $region27: #{tpu_custom_call.1} parent=1 // pred_check_branch
      %47 = sbr.rel (0) target = $region29
    $region28: #{tpu_custom_call.1} parent=1 // pred_region
      _
    $region29: #{tpu_custom_call.1} parent=1 // pred_fallthru
      _
    // Predicated region
    $region30: #{tpu_custom_call.1} parent=1 // pred_check
      _
    $region31: #{tpu_custom_call.1} parent=1 // pred_check_branch
      %49 = sbr.rel (0) target = $region33
    $region32: #{tpu_custom_call.1} parent=1 // pred_region
      _
    $region33: #{tpu_custom_call.1} parent=1 // pred_fallthru
      _
    // Predicated region
    $region34: #{tpu_custom_call.1} parent=1 // pred_check
      _
    $region35: #{tpu_custom_call.1} parent=1 // pred_check_branch
      %51 = sbr.rel (0) target = $region37
    $region36: #{tpu_custom_call.1} parent=1 // pred_region
      _
    $region37: #{tpu_custom_call.1} parent=1 // pred_fallthru
      _
    // Predicated region
    $region38: #{tpu_custom_call.1} parent=1 // pred_check
      _
    $region39: #{tpu_custom_call.1} parent=1 // pred_check_branch
      %53 = sbr.rel (0) target = $region41
    $region40: #{tpu_custom_call.1} parent=1 // pred_region
      _
    $region41: #{tpu_custom_call.1} parent=1 // pred_fallthru
      _
    // Predicated region
    $region42: #{tpu_custom_call.1} parent=1 // pred_check
      _
    $region43: #{tpu_custom_call.1} parent=1 // pred_check_branch
      %55 = sbr.rel (0) target = $region45
    $region44: #{tpu_custom_call.1} parent=1 // pred_region
      _
    $region45: #{tpu_custom_call.1} parent=1 // pred_fallthru
      _
    // Predicated region
    $region46: #{tpu_custom_call.1} parent=1 // pred_check
      _
    $region47: #{tpu_custom_call.1} parent=1 // pred_check_branch
      %57 = sbr.rel (0) target = $region49
    $region48: #{tpu_custom_call.1} parent=1 // pred_region
      _
    $region49: #{tpu_custom_call.1} parent=1 // pred_fallthru
      _
    // Predicated region
    $region50: #{tpu_custom_call.1} parent=1 // pred_check
      _
    $region51: #{tpu_custom_call.1} parent=1 // pred_check_branch
      %59 = sbr.rel (0) target = $region53
    $region52: #{tpu_custom_call.1} parent=1 // pred_region
      %61 = dma.done [#allocation7], 64
    $region53: #{tpu_custom_call.1} parent=1 // pred_fallthru
      _
    // Predicated region
    $region54: #{tpu_custom_call.1} parent=1 // pred_check
      _
    $region55: #{tpu_custom_call.1} parent=1 // pred_check_branch
      %63 = sbr.rel (0) target = $region57
    $region56: #{tpu_custom_call.1} parent=1 // pred_region
      %65 = dma.done [#allocation9], 16
    $region57: #{tpu_custom_call.1} parent=1 // pred_fallthru
      _
    %66 = sfence
    %v67 = vld [vmem:[%s0] sm:$0x1]
    %v68 = vld [vmem:[%s1] sm:$0xf]
    %vm69 = vcmask 125952
    %70 = vst.msk [vmem:[#allocation2] sm:$0xf] %vm69, %v68
    %s71 = scalar_lea.vmem %s1, 4
    %v72 = vld [vmem:[%s71] sm:$0xf]
    %74 = vrot.lane.b32.xlu0 %v72, 16
    %v75 = vpop.permute.xlu0 %74
    %vm77 = vcmask 257152
    %78 = vst.msk [vmem:[#allocation2] sm:$0xf] %vm77, %v75
    %vm79 = vcmask 7168
    %80 = vst.msk [vmem:[#allocation4] sm:$0xff] %vm79, 0.0
    %81 = vst.msk [vmem:[#allocation4 + $0x8] sm:$0xff] %vm79, 0.0
    %82 = vst.msk [vmem:[#allocation4 + $0x10] sm:$0xff] %vm79, 0.0
    %83 = vst.msk [vmem:[#allocation4 + $0x18] sm:$0xff] %vm79, 0.0
    %vm84 = vcmask 257024
    %85 = vst.msk [vmem:[#allocation3 + $0x4] sm:$0xf] %vm84, 0.0
    %86 = vst.msk [vmem:[#allocation3 + $0xc] sm:$0xf] %vm84, 0.0
    %87 = vst.msk [vmem:[#allocation3 + $0x14] sm:$0xf] %vm84, 0.0
    %88 = vst.msk [vmem:[#allocation3 + $0x1c] sm:$0xf] %vm84, 0.0
    %v89 = vld [vmem:[#allocation2] sm:$0xf]
    %s90 = sld [smem:[#allocation5]]
    %v91 = vstv %s90
    %v92 = vmul.f32 %v89, %v91
    %s93 = sld [smem:[#allocation5 + $0x80]]
    %v94 = vstv %s93
    %v95 = vmul.f32 %v89, %v94
    %s96 = sld [smem:[#allocation5 + $0x100]]
    %v97 = vstv %s96
    %v98 = vmul.f32 %v89, %v97
    %s99 = sld [smem:[#allocation5 + $0x180]]
    %v100 = vstv %s99
    %v101 = vmul.f32 %v89, %v100
    %s102 = sld [smem:[#allocation5 + $0x1]]
    %v103 = vstv %s102
    %v104 = vmul.f32 %v89, %v103
    %106 = vrot.lane.b32.xlu0 %v104, 127
    %v107 = vpop.permute.xlu0 %106
    %v109 = vadd.f32 %v92, %v107
    %s110 = sld [smem:[#allocation5 + $0x81]]
    %v111 = vstv %s110
    %v112 = vmul.f32 %v89, %v111
    %114 = vrot.lane.b32.xlu0 %v112, 127
    %v115 = vpop.permute.xlu0 %114
    %v117 = vadd.f32 %v95, %v115
    %s118 = sld [smem:[#allocation5 + $0x101]]
    %v119 = vstv %s118
    %v120 = vmul.f32 %v89, %v119
    %122 = vrot.lane.b32.xlu0 %v120, 127
    %v123 = vpop.permute.xlu0 %122
    %v125 = vadd.f32 %v98, %v123
    %s126 = sld [smem:[#allocation5 + $0x181]]
    %v127 = vstv %s126
    %v128 = vmul.f32 %v89, %v127
    %130 = vrot.lane.b32.xlu0 %v128, 127
    %v131 = vpop.permute.xlu0 %130
    %v133 = vadd.f32 %v101, %v131
    %s134 = sld [smem:[#allocation5 + $0x2]]
    %v135 = vstv %s134
    %v136 = vmul.f32 %v89, %v135
    %138 = vrot.lane.b32.xlu0 %v136, 126
    %v139 = vpop.permute.xlu0 %138
    %v141 = vadd.f32 %v109, %v139
    %s142 = sld [smem:[#allocation5 + $0x82]]
    %v143 = vstv %s142
    %v144 = vmul.f32 %v89, %v143
    %146 = vrot.lane.b32.xlu0 %v144, 126
    %v147 = vpop.permute.xlu0 %146
    %v149 = vadd.f32 %v117, %v147
    %s150 = sld [smem:[#allocation5 + $0x102]]
    %v151 = vstv %s150
    %v152 = vmul.f32 %v89, %v151
    %154 = vrot.lane.b32.xlu0 %v152, 126
    %v155 = vpop.permute.xlu0 %154
    %v157 = vadd.f32 %v125, %v155
    %s158 = sld [smem:[#allocation5 + $0x182]]
    %v159 = vstv %s158
    %v160 = vmul.f32 %v89, %v159
    %162 = vrot.lane.b32.xlu0 %v160, 126
    %v163 = vpop.permute.xlu0 %162
    %v165 = vadd.f32 %v133, %v163
    %s166 = sld [smem:[#allocation5 + $0x3]]
    %v167 = vstv %s166
    %v168 = vmul.f32 %v89, %v167
    %170 = vrot.lane.b32.xlu0 %v168, 125
    %v171 = vpop.permute.xlu0 %170
    %v173 = vadd.f32 %v141, %v171
    %s174 = sld [smem:[#allocation5 + $0x83]]
    %v175 = vstv %s174
    %v176 = vmul.f32 %v89, %v175
    %178 = vrot.lane.b32.xlu0 %v176, 125
    %v179 = vpop.permute.xlu0 %178
    %v181 = vadd.f32 %v149, %v179
    %s182 = sld [smem:[#allocation5 + $0x103]]
    %v183 = vstv %s182
    %v184 = vmul.f32 %v89, %v183
    %186 = vrot.lane.b32.xlu0 %v184, 125
    %v187 = vpop.permute.xlu0 %186
    %v189 = vadd.f32 %v157, %v187
    %s190 = sld [smem:[#allocation5 + $0x183]]
    %v191 = vstv %s190
    %v192 = vmul.f32 %v89, %v191
    %194 = vrot.lane.b32.xlu0 %v192, 125
    %v195 = vpop.permute.xlu0 %194
    %v197 = vadd.f32 %v165, %v195
    %s198 = sld [smem:[#allocation8]]
    %v199 = vstv %s198
    %v200 = vadd.f32 %v173, %v199
    %vm201 = vcmp.gt.f32.partialorder %v200, 0.0
    %v202 = vmul.f32 %v200, 1.442695
    %v203 = vpow.pop %v202
    %v204 = vsub.f32 %v203, 1.0
    %v205 = vsel %vm201, %v200, %v204
    %206 = vst.msk [vmem:[#allocation3] sm:$0xf] %vm84, %v205
    %s207 = sld [smem:[#allocation8 + $0x1]]
    %v208 = vstv %s207
    %v209 = vadd.f32 %v181, %v208
    %vm210 = vcmp.gt.f32.partialorder %v209, 0.0
    %v211 = vmul.f32 %v209, 1.442695
    %v212 = vpow.pop %v211
    %v213 = vsub.f32 %v212, 1.0
    %v214 = vsel %vm210, %v209, %v213
    %215 = vst.msk [vmem:[#allocation3 + $0x8] sm:$0xf] %vm84, %v214
    %s216 = sld [smem:[#allocation8 + $0x2]]
    %v217 = vstv %s216
    %v218 = vadd.f32 %v189, %v217
    %vm219 = vcmp.gt.f32.partialorder %v218, 0.0
    %v220 = vmul.f32 %v218, 1.442695
    %v221 = vpow.pop %v220
    %v222 = vsub.f32 %v221, 1.0
    %v223 = vsel %vm219, %v218, %v222
    %224 = vst.msk [vmem:[#allocation3 + $0x10] sm:$0xf] %vm84, %v223
    %s225 = sld [smem:[#allocation8 + $0x3]]
    %v226 = vstv %s225
    %v227 = vadd.f32 %v197, %v226
    %vm228 = vcmp.gt.f32.partialorder %v227, 0.0
    %v229 = vmul.f32 %v227, 1.442695
    %v230 = vpow.pop %v229
    %v231 = vsub.f32 %v230, 1.0
    %v232 = vsel %vm228, %v227, %v231
    %233 = vst.msk [vmem:[#allocation3 + $0x18] sm:$0xf] %vm84, %v232
    %v234 = vld [vmem:[%s4] sm:$0xff]
    %v235 = vld [vmem:[%s4 + $0x8] sm:$0xff]
    %v236 = vld [vmem:[#allocation3] sm:$0xff]
    %v237 = vld [vmem:[#allocation3 + $0x8] sm:$0xff]
    %v238 = vld [vmem:[#allocation3 + $0x10] sm:$0xff]
    %v239 = vld [vmem:[#allocation3 + $0x18] sm:$0xff]
    %v240 = vld [vmem:[%s5] sm:$0xff]
    %v241 = vld [vmem:[%s5 + $0x8] sm:$0xff]
    %243 = vset.pattern.permute.xlu0 0
    %244 = vperm.xlu0 %243, %v240
    %v245 = vpop.permute.xlu0 %244
    %248 = vset.pattern.permute.xlu0 0
    %249 = vperm.xlu0 %248, %v241
    %v250 = vpop.permute.xlu0 %249
    %vm252 = vcmask 261120
    %v254 = vsel %vm252, %v234, 0
    %v257 = vsel %vm252, %v235, 0
    %259 = vmatpush.msra.mxu0 0.0
    %260 = vmatpush.msra.mxu0 0.0
    %261 = vmatpush.msra.mxu0 0.0
    %262 = vmatpush.msra.mxu0 0.0
    %263 = vmatpush.msra.mxu0 0.0
    %264 = vmatpush.msra.mxu0 0.0
    %265 = vmatpush.msra.mxu0 0.0
    %266 = vmatpush.msra.mxu0 0.0
    %267 = vmatpush.msra.mxu0 0.0
    %268 = vmatpush.msra.mxu0 0.0
    %269 = vmatpush.msra.mxu0 0.0
    %270 = vmatpush.msra.mxu0 0.0
    %271 = vmatpush.msra.mxu0 %v239
    %272 = vmatpush.msra.mxu0 %v238
    %273 = vmatpush.msra.mxu0 %v237
    %274 = vmatpush.msra.mxu0 %v236
    %275 = vmatmul.f32.gmra.mxu0 %v254
    %v276 = vpop.f32.mrf.mxu0
    %v277 = vadd.f32 %v245, %v276
    %278 = vmatmul.f32.gmra.mxu0 %v257
    %v279 = vpop.f32.mrf.mxu0
    %v280 = vadd.f32 %v250, %v279
    %281 = vdwg.mxu0
    %vm282 = vcmp.gt.f32.partialorder %v277, 0.0
    %vm283 = vcmp.gt.f32.partialorder %v280, 0.0
    %v284 = vmul.f32 %v277, 1.442695
    %v285 = vpow.pop %v284
    %v286 = vmul.f32 %v280, 1.442695
    %v287 = vpow.pop %v286
    %v288 = vsub.f32 %v285, 1.0
    %v289 = vsub.f32 %v287, 1.0
    %v290 = vsel %vm282, %v277, %v288
    %v291 = vsel %vm283, %v280, %v289
    %vm292 = vcmp.lt.s32.totalorder %v67, 13
    %v293 = vsel %vm292, 1, 0
    %v294 = vperm.slane %v293, 0
    %vm295 = vcmp.eq.s32.totalorder %v294, 1
    %v296 = vsel %vm295, %v290, 0.0
    %v297 = vsel %vm295, %v291, 0.0
    %300 = vrot.lane.b32.xlu0 %v296, 1
    %v301 = vpop.permute.xlu0 %300
    %302 = vrot.lane.b32.xlu0 %v297, 1
    %v303 = vpop.permute.xlu0 %302
    %vm306 = vcmask 269320
    %307 = vst.msk [vmem:[#allocation4] sm:$0xff] %vm306, %v301
    %308 = vst.msk [vmem:[#allocation4 + $0x8] sm:$0xff] %vm306, %v303
    %v309 = vld [vmem:[#allocation4] sm:$0xff]
    %v310 = vld [vmem:[#allocation4 + $0x8] sm:$0xff]
    %v311 = vld [vmem:[%s6] sm:$0xff]
    %v312 = vld [vmem:[%s6 + $0x8] sm:$0xff]
    %314 = vset.pattern.permute.xlu0 0
    %315 = vperm.xlu0 %314, %v311
    %v316 = vpop.permute.xlu0 %315
    %319 = vset.pattern.permute.xlu0 0
    %320 = vperm.xlu0 %319, %v312
    %v321 = vpop.permute.xlu0 %320
    %v323 = vmul.f32 %v316, %v309
    %v324 = vmul.f32 %v321, %v310
    %325 = vset.pattern.permute.xlu0 1
    %326 = vperm.xlu0 %325, %v311
    %v327 = vpop.permute.xlu0 %326
    %329 = vset.pattern.permute.xlu0 1
    %330 = vperm.xlu0 %329, %v312
    %v331 = vpop.permute.xlu0 %330
    %v333 = vmul.f32 %v327, %v309
    %v334 = vmul.f32 %v331, %v310
    %337 = vrot.lane.b32.xlu0 %v333, 127
    %v338 = vpop.permute.xlu0 %337
    %339 = vrot.lane.b32.xlu0 %v334, 127
    %v340 = vpop.permute.xlu0 %339
    %v343 = vadd.f32 %v323, %v338
    %v344 = vadd.f32 %v324, %v340
    %345 = vset.pattern.permute.xlu0 2
    %346 = vperm.xlu0 %345, %v311
    %v347 = vpop.permute.xlu0 %346
    %349 = vset.pattern.permute.xlu0 2
    %350 = vperm.xlu0 %349, %v312
    %v351 = vpop.permute.xlu0 %350
    %v353 = vmul.f32 %v347, %v309
    %v354 = vmul.f32 %v351, %v310
    %357 = vrot.lane.b32.xlu0 %v353, 126
    %v358 = vpop.permute.xlu0 %357
    %359 = vrot.lane.b32.xlu0 %v354, 126
    %v360 = vpop.permute.xlu0 %359
    %v363 = vadd.f32 %v343, %v358
    %v364 = vadd.f32 %v344, %v360
    %v365 = vld [vmem:[%s7] sm:$0xff]
    %v366 = vld [vmem:[%s7 + $0x8] sm:$0xff]
    %v367 = vld [vmem:[%s7 + $0x10] sm:$0xff]
    %v368 = vld [vmem:[%s7 + $0x18] sm:$0xff]
    %v369 = vld [vmem:[%s8] sm:$0xff]
    %v370 = vld [vmem:[%s8 + $0x8] sm:$0xff]
    %v371 = vld [vmem:[%s8 + $0x10] sm:$0xff]
    %v372 = vld [vmem:[%s8 + $0x18] sm:$0xff]
    %374 = vset.pattern.permute.xlu0 0
    %375 = vperm.xlu0 %374, %v369
    %v376 = vpop.permute.xlu0 %375
    %379 = vset.pattern.permute.xlu0 0
    %380 = vperm.xlu0 %379, %v370
    %v381 = vpop.permute.xlu0 %380
    %384 = vset.pattern.permute.xlu0 0
    %385 = vperm.xlu0 %384, %v371
    %v386 = vpop.permute.xlu0 %385
    %389 = vset.pattern.permute.xlu0 0
    %390 = vperm.xlu0 %389, %v372
    %v391 = vpop.permute.xlu0 %390
    %vm393 = vcmask 130048
    %v395 = vsel %vm393, %v365, 0
    %v398 = vsel %vm393, %v366, 0
    %v401 = vsel %vm393, %v367, 0
    %v404 = vsel %vm393, %v368, 0
    %406 = vmatpush.msra.mxu0 0.0
    %407 = vmatpush.msra.mxu0 0.0
    %408 = vmatpush.msra.mxu0 0.0
    %409 = vmatpush.msra.mxu0 0.0
    %410 = vmatpush.msra.mxu0 0.0
    %411 = vmatpush.msra.mxu0 0.0
    %412 = vmatpush.msra.mxu0 0.0
    %413 = vmatpush.msra.mxu0 0.0
    %414 = vmatpush.msra.mxu0 0.0
    %415 = vmatpush.msra.mxu0 0.0
    %416 = vmatpush.msra.mxu0 0.0
    %417 = vmatpush.msra.mxu0 0.0
    %418 = vmatpush.msra.mxu0 0.0
    %419 = vmatpush.msra.mxu0 0.0
    %420 = vmatpush.msra.mxu0 %v364
    %421 = vmatpush.msra.mxu0 %v363
    %422 = vmatmul.f32.gmra.mxu0 %v395
    %v423 = vpop.f32.mrf.mxu0
    %v424 = vadd.f32 %v376, %v423
    %425 = vmatmul.f32.gmra.mxu0 %v398
    %v426 = vpop.f32.mrf.mxu0
    %v427 = vadd.f32 %v381, %v426
    %428 = vmatmul.f32.gmra.mxu0 %v401
    %v429 = vpop.f32.mrf.mxu0
    %v430 = vadd.f32 %v386, %v429
    %431 = vmatmul.f32.gmra.mxu0 %v404
    %v432 = vpop.f32.mrf.mxu0
    %v433 = vadd.f32 %v391, %v432
    %434 = vdwg.mxu0
    %vm435 = vcmp.gt.f32.partialorder %v424, 0.0
    %vm436 = vcmp.gt.f32.partialorder %v427, 0.0
    %vm437 = vcmp.gt.f32.partialorder %v430, 0.0
    %vm438 = vcmp.gt.f32.partialorder %v433, 0.0
    %v439 = vmul.f32 %v424, 1.442695
    %v440 = vpow.pop %v439
    %v441 = vmul.f32 %v427, 1.442695
    %v442 = vpow.pop %v441
    %v443 = vmul.f32 %v430, 1.442695
    %v444 = vpow.pop %v443
    %v445 = vmul.f32 %v433, 1.442695
    %v446 = vpow.pop %v445
    %v447 = vsub.f32 %v440, 1.0
    %v448 = vsub.f32 %v442, 1.0
    %v449 = vsub.f32 %v444, 1.0
    %v450 = vsub.f32 %v446, 1.0
    %v451 = vsel %vm435, %v424, %v447
    %v452 = vsel %vm436, %v427, %v448
    %v453 = vsel %vm437, %v430, %v449
    %v454 = vsel %vm438, %v433, %v450
    %v455 = vsel %vm295, %v451, 0.0
    %v456 = vsel %vm295, %v452, 0.0
    %v457 = vsel %vm295, %v453, 0.0
    %v458 = vsel %vm295, %v454, 0.0
    %463 = vrot.lane.b32.xlu0 %v455, 1
    %v464 = vpop.permute.xlu0 %463
    %465 = vrot.lane.b32.xlu0 %v456, 1
    %v466 = vpop.permute.xlu0 %465
    %467 = vrot.lane.b32.xlu0 %v457, 1
    %v468 = vpop.permute.xlu0 %467
    %469 = vrot.lane.b32.xlu0 %v458, 1
    %v470 = vpop.permute.xlu0 %469
    %475 = vst.msk [vmem:[#allocation4] sm:$0xff] %vm306, %v464
    %476 = vst.msk [vmem:[#allocation4 + $0x8] sm:$0xff] %vm306, %v466
    %477 = vst.msk [vmem:[#allocation4 + $0x10] sm:$0xff] %vm306, %v468
    %478 = vst.msk [vmem:[#allocation4 + $0x18] sm:$0xff] %vm306, %v470
    %v479 = vld [vmem:[#allocation4] sm:$0xff]
    %v480 = vld [vmem:[#allocation4 + $0x8] sm:$0xff]
    %v481 = vld [vmem:[#allocation4 + $0x10] sm:$0xff]
    %v482 = vld [vmem:[#allocation4 + $0x18] sm:$0xff]
    %v483 = vld [vmem:[%s9] sm:$0xff]
    %v484 = vld [vmem:[%s9 + $0x8] sm:$0xff]
    %v485 = vld [vmem:[%s9 + $0x10] sm:$0xff]
    %v486 = vld [vmem:[%s9 + $0x18] sm:$0xff]
    %488 = vset.pattern.permute.xlu0 0
    %489 = vperm.xlu0 %488, %v483
    %v490 = vpop.permute.xlu0 %489
    %493 = vset.pattern.permute.xlu0 0
    %494 = vperm.xlu0 %493, %v484
    %v495 = vpop.permute.xlu0 %494
    %498 = vset.pattern.permute.xlu0 0
    %499 = vperm.xlu0 %498, %v485
    %v500 = vpop.permute.xlu0 %499
    %503 = vset.pattern.permute.xlu0 0
    %504 = vperm.xlu0 %503, %v486
    %v505 = vpop.permute.xlu0 %504
    %v507 = vmul.f32 %v490, %v479
    %v508 = vmul.f32 %v495, %v480
    %v509 = vmul.f32 %v500, %v481
    %v510 = vmul.f32 %v505, %v482
    %511 = vset.pattern.permute.xlu0 1
    %512 = vperm.xlu0 %511, %v483
    %v513 = vpop.permute.xlu0 %512
    %515 = vset.pattern.permute.xlu0 1
    %516 = vperm.xlu0 %515, %v484
    %v517 = vpop.permute.xlu0 %516
    %519 = vset.pattern.permute.xlu0 1
    %520 = vperm.xlu0 %519, %v485
    %v521 = vpop.permute.xlu0 %520
    %523 = vset.pattern.permute.xlu0 1
    %524 = vperm.xlu0 %523, %v486
    %v525 = vpop.permute.xlu0 %524
    %v527 = vmul.f32 %v513, %v479
    %v528 = vmul.f32 %v517, %v480
    %v529 = vmul.f32 %v521, %v481
    %v530 = vmul.f32 %v525, %v482
    %535 = vrot.lane.b32.xlu0 %v527, 127
    %v536 = vpop.permute.xlu0 %535
    %537 = vrot.lane.b32.xlu0 %v528, 127
    %v538 = vpop.permute.xlu0 %537
    %539 = vrot.lane.b32.xlu0 %v529, 127
    %v540 = vpop.permute.xlu0 %539
    %541 = vrot.lane.b32.xlu0 %v530, 127
    %v542 = vpop.permute.xlu0 %541
    %v547 = vadd.f32 %v507, %v536
    %v548 = vadd.f32 %v508, %v538
    %v549 = vadd.f32 %v509, %v540
    %v550 = vadd.f32 %v510, %v542
    %551 = vset.pattern.permute.xlu0 2
    %552 = vperm.xlu0 %551, %v483
    %v553 = vpop.permute.xlu0 %552
    %555 = vset.pattern.permute.xlu0 2
    %556 = vperm.xlu0 %555, %v484
    %v557 = vpop.permute.xlu0 %556
    %559 = vset.pattern.permute.xlu0 2
    %560 = vperm.xlu0 %559, %v485
    %v561 = vpop.permute.xlu0 %560
    %563 = vset.pattern.permute.xlu0 2
    %564 = vperm.xlu0 %563, %v486
    %v565 = vpop.permute.xlu0 %564
    %v567 = vmul.f32 %v553, %v479
    %v568 = vmul.f32 %v557, %v480
    %v569 = vmul.f32 %v561, %v481
    %v570 = vmul.f32 %v565, %v482
    %575 = vrot.lane.b32.xlu0 %v567, 126
    %v576 = vpop.permute.xlu0 %575
    %577 = vrot.lane.b32.xlu0 %v568, 126
    %v578 = vpop.permute.xlu0 %577
    %579 = vrot.lane.b32.xlu0 %v569, 126
    %v580 = vpop.permute.xlu0 %579
    %581 = vrot.lane.b32.xlu0 %v570, 126
    %v582 = vpop.permute.xlu0 %581
    %v587 = vadd.f32 %v547, %v576
    %v588 = vadd.f32 %v548, %v578
    %v589 = vadd.f32 %v549, %v580
    %v590 = vadd.f32 %v550, %v582
    %v591 = vld [vmem:[%s10] sm:$0xff]
    %v592 = vld [vmem:[%s10 + $0x8] sm:$0xff]
    %v593 = vld [vmem:[%s10 + $0x10] sm:$0xff]
    %v594 = vld [vmem:[%s10 + $0x18] sm:$0xff]
    %v595 = vld [vmem:[%s11] sm:$0xff]
    %v596 = vld [vmem:[%s11 + $0x8] sm:$0xff]
    %v597 = vld [vmem:[%s11 + $0x10] sm:$0xff]
    %v598 = vld [vmem:[%s11 + $0x18] sm:$0xff]
    %600 = vset.pattern.permute.xlu0 0
    %601 = vperm.xlu0 %600, %v595
    %v602 = vpop.permute.xlu0 %601
    %605 = vset.pattern.permute.xlu0 0
    %606 = vperm.xlu0 %605, %v596
    %v607 = vpop.permute.xlu0 %606
    %610 = vset.pattern.permute.xlu0 0
    %611 = vperm.xlu0 %610, %v597
    %v612 = vpop.permute.xlu0 %611
    %615 = vset.pattern.permute.xlu0 0
    %616 = vperm.xlu0 %615, %v598
    %v617 = vpop.permute.xlu0 %616
    %v620 = vsel %vm252, %v591, 0
    %v623 = vsel %vm252, %v592, 0
    %v626 = vsel %vm252, %v593, 0
    %v629 = vsel %vm252, %v594, 0
    %631 = vmatpush.msra.mxu0 0.0
    %632 = vmatpush.msra.mxu0 0.0
    %633 = vmatpush.msra.mxu0 0.0
    %634 = vmatpush.msra.mxu0 0.0
    %635 = vmatpush.msra.mxu0 0.0
    %636 = vmatpush.msra.mxu0 0.0
    %637 = vmatpush.msra.mxu0 0.0
    %638 = vmatpush.msra.mxu0 0.0
    %639 = vmatpush.msra.mxu0 0.0
    %640 = vmatpush.msra.mxu0 0.0
    %641 = vmatpush.msra.mxu0 0.0
    %642 = vmatpush.msra.mxu0 0.0
    %643 = vmatpush.msra.mxu0 %v590
    %644 = vmatpush.msra.mxu0 %v589
    %645 = vmatpush.msra.mxu0 %v588
    %646 = vmatpush.msra.mxu0 %v587
    %647 = vmatmul.f32.gmra.mxu0 %v620
    %v648 = vpop.f32.mrf.mxu0
    %v649 = vadd.f32 %v602, %v648
    %650 = vmatmul.f32.gmra.mxu0 %v623
    %v651 = vpop.f32.mrf.mxu0
    %v652 = vadd.f32 %v607, %v651
    %653 = vmatmul.f32.gmra.mxu0 %v626
    %v654 = vpop.f32.mrf.mxu0
    %v655 = vadd.f32 %v612, %v654
    %656 = vmatmul.f32.gmra.mxu0 %v629
    %v657 = vpop.f32.mrf.mxu0
    %v658 = vadd.f32 %v617, %v657
    %659 = vdwg.mxu0
    %vm660 = vcmp.gt.f32.partialorder %v649, 0.0
    %vm661 = vcmp.gt.f32.partialorder %v652, 0.0
    %vm662 = vcmp.gt.f32.partialorder %v655, 0.0
    %vm663 = vcmp.gt.f32.partialorder %v658, 0.0
    %v664 = vmul.f32 %v649, 1.442695
    %v665 = vpow.pop %v664
    %v666 = vmul.f32 %v652, 1.442695
    %v667 = vpow.pop %v666
    %v668 = vmul.f32 %v655, 1.442695
    %v669 = vpow.pop %v668
    %v670 = vmul.f32 %v658, 1.442695
    %v671 = vpow.pop %v670
    %v672 = vsub.f32 %v665, 1.0
    %v673 = vsub.f32 %v667, 1.0
    %v674 = vsub.f32 %v669, 1.0
    %v675 = vsub.f32 %v671, 1.0
    %v676 = vsel %vm660, %v649, %v672
    %v677 = vsel %vm661, %v652, %v673
    %v678 = vsel %vm662, %v655, %v674
    %v679 = vsel %vm663, %v658, %v675
    %vm680 = vcmask 105472
    %v681 = vsel %vm680, %v676, -inf
    %682 = vmax.xlane.f32.xlu0 %v681
    %v683 = vpop.xlane.xlu0 %682
    %v684 = vsel %vm680, %v677, -inf
    %685 = vmax.xlane.f32.xlu0 %v684
    %v686 = vpop.xlane.xlu0 %685
    %v687 = vsel %vm680, %v678, -inf
    %688 = vmax.xlane.f32.xlu0 %v687
    %v689 = vpop.xlane.xlu0 %688
    %v690 = vsel %vm680, %v679, -inf
    %691 = vmax.xlane.f32.xlu0 %v690
    %v692 = vpop.xlane.xlu0 %691
    %v697 = vlaneseq
    %v698 = vand.u32 %v697, 127
    %v699 = vperm.slane %v683, %v698
    %v700 = vadd.s32 %v698, 4294967288
    %v701 = vperm.slane %v686, %v700
    %vm702 = vcmask 130112
    %v703 = vsel %vm702, %v701, %v699
    %v704 = vadd.s32 %v698, 4294967280
    %v705 = vperm.slane %v689, %v704
    %vm706 = vcmask 195712
    %v707 = vsel %vm706, %v705, %v703
    %v708 = vadd.s32 %v698, 4294967272
    %v709 = vperm.slane %v692, %v708
    %vm710 = vcmask 261312
    %v711 = vsel %vm710, %v709, %v707
    %vm713 = vcmask 253952
    %714 = vst.msk [vmem:[#allocation10] sm:$0x1] %vm713, %v711
    %vm715 = vcmask 236672
    %v716 = vsel %vm715, %v676, -inf
    %717 = vmax.xlane.f32.xlu0 %v716
    %v718 = vpop.xlane.xlu0 %717
    %v719 = vsel %vm715, %v677, -inf
    %720 = vmax.xlane.f32.xlu0 %v719
    %v721 = vpop.xlane.xlu0 %720
    %v722 = vsel %vm715, %v678, -inf
    %723 = vmax.xlane.f32.xlu0 %v722
    %v724 = vpop.xlane.xlu0 %723
    %v725 = vsel %vm715, %v679, -inf
    %726 = vmax.xlane.f32.xlu0 %v725
    %v727 = vpop.xlane.xlu0 %726
    %v732 = vperm.slane %v718, %v698
    %v733 = vperm.slane %v721, %v700
    %v734 = vsel %vm702, %v733, %v732
    %v735 = vperm.slane %v724, %v704
    %v736 = vsel %vm706, %v735, %v734
    %v737 = vperm.slane %v727, %v708
    %v738 = vsel %vm710, %v737, %v736
    %740 = vst.msk [vmem:[#allocation10 + $0x1] sm:$0x1] %vm713, %v738
    // Predicated region
    $region58: #{tpu_custom_call.1} parent=1 // pred_check
      _
    $region59: #{tpu_custom_call.1} parent=1 // pred_check_branch
      %742 = sbr.rel (0) target = $region61
    $region60: #{tpu_custom_call.1} parent=1 // pred_region
      %744 = vsyncadd [#allocation6], 0
      %s746 = sshll.u32 [#allocation10], 4
      %s747 = int_to_ptr.vmem [resolvable:$true] %s746
      %s748 = sshll.u32 %s12, 4
      %s749 = int_to_ptr.hbm [resolvable:$true] %s748
      %751 = dma.vmem_to_hbm [thread:$0]  %s747, 32, %s749, [#allocation6]
    $region61: #{tpu_custom_call.1} parent=1 // pred_fallthru
      _
    // Predicated region
    $region62: #{tpu_custom_call.1} parent=1 // pred_check
      _
    $region63: #{tpu_custom_call.1} parent=1 // pred_check_branch
      %753 = sbr.rel (0) target = $region65
    $region64: #{tpu_custom_call.1} parent=1 // pred_region
      %755 = dma.done [#allocation6], 32
    $region65: #{tpu_custom_call.1} parent=1 // pred_fallthru
      _
    %756 = vsyncpa [#allocation6], 1
    %757 = vsyncpa [#allocation7], 1
    %758 = vsyncpa [#allocation9], 1

</llo_original>
